<compile_context>
chip_gen: v5e
topology: v5e:2x2
jax: 0.10.0
libtpu: 0.0.40
codegen_flags: <defaults>
</compile_context>

<pallas_src>
import jax
import jax.numpy as jnp
from jax import lax
from jax.experimental import pallas as pl
from jax.experimental.pallas import tpu as pltpu

BN_EPS = 1e-5
LEAKY_SLOPE = 0.01


# ----------------------------------------------------------------------------
# shared in-kernel helpers (operate on loaded values)
# ----------------------------------------------------------------------------
def _transfer_mlp(att_img, w1, b1, w2, b2):
    h = jnp.dot(att_img, w1, preferred_element_type=jnp.float32) + b1
    h = jnp.where(h > 0, h, LEAKY_SLOPE * h)                    # LeakyReLU
    return jnp.tanh(jnp.dot(h, w2, preferred_element_type=jnp.float32) + b2)


def _classifier(att_img, acc, w1a, w1b, b1, gamma, beta, mean, var, w2, b2):
    # torch.cat([att_img, acc], 1) @ W1  ==  att_img @ W1[:C] + acc @ W1[C:]
    h = (jnp.dot(att_img, w1a, preferred_element_type=jnp.float32)
         + jnp.dot(acc, w1b, preferred_element_type=jnp.float32) + b1)
    h = (h - mean) * lax.rsqrt(var + BN_EPS) * gamma + beta     # BatchNorm1d (eval)
    h = jnp.maximum(h, 0.0)                                     # ReLU (Dropout = id)
    return jnp.dot(h, w2, preferred_element_type=jnp.float32) + b2


# ----------------------------------------------------------------------------
# fused kernel, gate=False path (no_text_in_test=True): text axis T == 1
# ----------------------------------------------------------------------------
def _make_fused_kernel_notext(M):
    inv_m = 1.0 / float(M)

    def kernel(img_ref, tlast_ref,
               tw1_ref, tb1_ref, tw2_ref, tb2_ref,
               wg_ref, bg_ref, wws_ref, bwsum_ref,
               cw1a_ref, cw1b_ref, cb1_ref,
               bng_ref, bnb_ref, bnm_ref, bnv_ref, cw2_ref, cb2_ref,
               out_ref, tloss_ref):
        img = img_ref[...]                                   # (B, C, N)
        att_img = jnp.mean(img, axis=2)                      # (B, C)  torch.mean(dim=2)
        tt = _transfer_mlp(att_img, tw1_ref[...], tb1_ref[...],
                           tw2_ref[...], tb2_ref[...])       # (B, Hid)
        tloss_ref[...] = (tt - tlast_ref[...]) ** 2          # F.mse_loss(reduce=False)

        # NonLocal blocks with T == 1: softmax over a length-1 axis is exactly
        # one, so att @ g broadcasts g and  z.mean(spatial) = g_m@W_m + bW_m +
        # att_img.  All M module weights are packed along the output axis, so
        # the whole stack is two lane-dense matmuls.
        g_all = jnp.dot(tt, wg_ref[...],
                        preferred_element_type=jnp.float32) + bg_ref[...]      # (B, M*A)
        wsum = jnp.dot(g_all, wws_ref[...],
                       preferred_element_type=jnp.float32) + bwsum_ref[...]    # (B, C) summed over modules
        acc = att_img + wsum * inv_m                          # .div_(num_rn_module)

        out_ref[...] = _classifier(att_img, acc,
                                   cw1a_ref[...], cw1b_ref[...], cb1_ref[...],
                                   bng_ref[...], bnb_ref[...], bnm_ref[...],
                                   bnv_ref[...], cw2_ref[...], cb2_ref[...])
    return kernel


# ----------------------------------------------------------------------------
# fused kernel, gate=True path: NonLocal blocks consume text features (T > 1)
# ----------------------------------------------------------------------------
def _make_fused_kernel_text(B, M, A):
    inv_m = 1.0 / float(M)

    def kernel(img_ref, text_ref, tlast_ref,
               tw1_ref, tb1_ref, tw2_ref, tb2_ref,
               wg_ref, bg_ref, wth_ref, bth_ref, wph_ref, bph_ref,
               wws_ref, bwsum_ref,
               cw1a_ref, cw1b_ref, cb1_ref,
               bng_ref, bnb_ref, bnm_ref, bnv_ref, cw2_ref, cb2_ref,
               out_ref, tloss_ref, att_ref):
        img = img_ref[...]                                   # (B, C, N)
        text = text_ref[...]                                 # (B, Hid, T)
        att_img = jnp.mean(img, axis=2)                      # (B, C)
        tt = _transfer_mlp(att_img, tw1_ref[...], tb1_ref[...],
                           tw2_ref[...], tb2_ref[...])
        tloss_ref[...] = (tt - tlast_ref[...]) ** 2

        wg, bg = wg_ref[...], bg_ref[...]
        wth, bth = wth_ref[...], bth_ref[...]
        wph, bph = wph_ref[...], bph_ref[...]
        wws, bwsum = wws_ref[...], bwsum_ref[...]

        acc_rows = []
        for b in range(B):                                   # tiny static unroll
            img_nc = img[b].T                                # (N, C) channels-last
            tf = text[b].T                                   # (T, Hid)
            # packed per-module projections (one matmul each for all M modules)
            theta = jnp.dot(img_nc, wth,
                            preferred_element_type=jnp.float32) + bth    # (N, M*A)
            phi = jnp.dot(tf, wph,
                          preferred_element_type=jnp.float32) + bph      # (T, M*A)
            g = jnp.dot(tf, wg,
                        preferred_element_type=jnp.float32) + bg         # (T, M*A)
            ys = []
            for m in range(M):
                sl = slice(m * A, (m + 1) * A)
                f = jnp.dot(theta[:, sl], phi[:, sl].T,
                            preferred_element_type=jnp.float32)          # (N, T)
                f = f - jnp.max(f, axis=-1, keepdims=True)
                e = jnp.exp(f)
                att = e * pl.reciprocal(jnp.sum(e, axis=-1, keepdims=True),
                                        approx=True)                     # softmax over T
                ys.append(jnp.dot(att, g[:, sl],
                                  preferred_element_type=jnp.float32))   # (N, A)
                att_ref[b * M + m] = att.T                  # lane-dense (T, N) store
            y_all = jnp.concatenate(ys, axis=1)             # (N, M*A)
            wy = jnp.dot(y_all, wws,
                         preferred_element_type=jnp.float32) + bwsum     # (N, C) summed over m
            acc_rows.append(att_img[b:b + 1]
                            + jnp.mean(wy, axis=0, keepdims=True) * inv_m)
        acc = jnp.concatenate(acc_rows, axis=0)             # (B, C)

        out_ref[...] = _classifier(att_img, acc,
                                   cw1a_ref[...], cw1b_ref[...], cb1_ref[...],
                                   bng_ref[...], bnb_ref[...], bnm_ref[...],
                                   bnv_ref[...], cw2_ref[...], cb2_ref[...])
    return kernel


# ----------------------------------------------------------------------------
# wrapper
# ----------------------------------------------------------------------------
def _full_spec(shape):
    nd = len(shape)
    return pl.BlockSpec(shape, lambda i, _nd=nd: (0,) * _nd)


def _full_specs(arrays):
    return [_full_spec(a.shape) for a in arrays]


def multimodal_forward(img_feat, text_feat, text_feat_last, pp, use_text=False):
    """Eval-mode MultiModal._forward (Dropout2d/Dropout are identities).

    use_text=False -> sampleGate()==False (no_text_in_test=True): every NonLocal
                      block consumes transfer_text (text axis length 1).
    use_text=True  -> sampleGate()==True: NonLocal blocks consume text_feat.
    """
    B, C, H, W = img_feat.shape
    N = H * W
    M, A = pp["M"], pp["A"]
    Hid = pp["t_w2"].shape[1]
    ncls = pp["c_w2"].shape[1]
    img_vec = img_feat.reshape(B, C, N)        # free reshape; no wrapper transpose

    common_w = (pp["t_w1"], pp["t_b1"], pp["t_w2"], pp["t_b2"])
    cls_w = (pp["c_w1a"], pp["c_w1b"], pp["c_b1"], pp["bn_gamma"], pp["bn_beta"],
             pp["bn_mean"], pp["bn_var"], pp["c_w2"], pp["c_b2"])
    cparams = pltpu.CompilerParams(dimension_semantics=("arbitrary",))

    if not use_text:
        args = (img_vec, text_feat_last) + common_w + (
            pp["wg_cat"], pp["bg_cat"], pp["ww_stack"], pp["bw_sum"]) + cls_w
        out_shape = (jax.ShapeDtypeStruct((B, ncls), jnp.float32),
                     jax.ShapeDtypeStruct((B, Hid), jnp.float32))
        out, tloss = pl.pallas_call(
            _make_fused_kernel_notext(M),
            grid=(1,),
            in_specs=_full_specs(args),
            out_specs=tuple(_full_spec(s.shape) for s in out_shape),
            out_shape=out_shape,
            compiler_params=cparams,
        )(*args)
        # softmax over the length-1 text axis is identically one (exact).
        attention = jnp.ones((B, M, N, 1), jnp.float32)
        return out, tloss, attention

    T = text_feat.shape[2]
    args = (img_vec, text_feat, text_feat_last) + common_w + (
        pp["wg_cat"], pp["bg_cat"], pp["wth_cat"], pp["bth_cat"],
        pp["wph_cat"], pp["bph_cat"], pp["ww_stack"], pp["bw_sum"]) + cls_w
    out_shape = (jax.ShapeDtypeStruct((B, ncls), jnp.float32),
                 jax.ShapeDtypeStruct((B, Hid), jnp.float32),
                 jax.ShapeDtypeStruct((B * M, T, N), jnp.float32))
    out, tloss, att_raw = pl.pallas_call(
        _make_fused_kernel_text(B, M, A),
        grid=(1,),
        in_specs=_full_specs(args),
        out_specs=tuple(_full_spec(s.shape) for s in out_shape),
        out_shape=out_shape,
        compiler_params=cparams,
    )(*args)
    # kernel stores lane-dense (T, N); restore the (B, M, N, T) API layout.
    attention = jnp.transpose(att_raw.reshape(B, M, T, N), (0, 1, 3, 2))
    return out, tloss, attention


# ----------------------------------------------------------------------------
# parameter packing (done once, outside the hot path)
# ----------------------------------------------------------------------------
def pack_params(p):
    M, Hid, A = p["nl_wg"].shape
    C = p["nl_wth"].shape[1]
    return dict(
        t_w1=p["t_w1"], t_b1=p["t_b1"], t_w2=p["t_w2"], t_b2=p["t_b2"],
        # per-module 1x1 projections packed along the output axis (M*A)
        wg_cat=jnp.transpose(p["nl_wg"], (1, 0, 2)).reshape(Hid, M * A),
        bg_cat=p["nl_bg"].reshape(1, M * A),
        wth_cat=jnp.transpose(p["nl_wth"], (1, 0, 2)).reshape(C, M * A),
        bth_cat=p["nl_bth"].reshape(1, M * A),
        wph_cat=jnp.transpose(p["nl_wph"], (1, 0, 2)).reshape(Hid, M * A),
        bph_cat=p["nl_bph"].reshape(1, M * A),
        # back-projection stacked so y_all @ ww_stack == sum_m y_m @ ww_m
        ww_stack=p["nl_ww"].reshape(M * A, C),
        bw_sum=jnp.sum(p["nl_bw"], axis=0),
        # classifier W1 split replaces the torch.cat
        c_w1a=p["c_w1"][:C], c_w1b=p["c_w1"][C:], c_b1=p["c_b1"],
        bn_gamma=p["bn_gamma"], bn_beta=p["bn_beta"],
        bn_mean=p["bn_mean"], bn_var=p["bn_var"],
        c_w2=p["c_w2"], c_b2=p["c_b2"],
        M=int(M), A=int(A),
    )


# ----------------------------------------------------------------------------
# Pure-JAX reference (uses the RAW per-module params)
# ----------------------------------------------------------------------------
def reference_forward(img_feat, text_feat, text_feat_last, p, use_text=False):
    B, C, H, W = img_feat.shape
    N = H * W
    img_vec = img_feat.reshape(B, C, N)
    att_img = img_vec.mean(axis=2)
    h = att_img @ p["t_w1"] + p["t_b1"]
    h = jnp.where(h > 0, h, LEAKY_SLOPE * h)
    tt = jnp.tanh(h @ p["t_w2"] + p["t_b2"])
    tloss = (tt - text_feat_last) ** 2
    tf = jnp.transpose(text_feat, (0, 2, 1)) if use_text else tt[:, None, :]
    imgv = jnp.transpose(img_vec, (0, 2, 1))
    M = p["nl_wg"].shape[0]
    acc = 0.0
    atts = []
    for m in range(M):
        g = tf @ p["nl_wg"][m] + p["nl_bg"][m]
        th = imgv @ p["nl_wth"][m] + p["nl_bth"][m]
        ph = tf @ p["nl_wph"][m] + p["nl_bph"][m]
        f = th @ jnp.transpose(ph, (0, 2, 1))
        att = jax.nn.softmax(f, axis=-1)
        z = att @ g @ p["nl_ww"][m] + p["nl_bw"][m] + imgv
        acc = acc + z.mean(axis=1)
        atts.append(att)
    acc = acc / M
    feat = jnp.concatenate([att_img, acc], axis=1)
    h = feat @ p["c_w1"] + p["c_b1"]
    h = (h - p["bn_mean"]) / jnp.sqrt(p["bn_var"] + BN_EPS) * p["bn_gamma"] + p["bn_beta"]
    h = jnp.maximum(h, 0.0)
    out = h @ p["c_w2"] + p["c_b2"]
    return out, tloss, jnp.stack(atts, axis=1)


def init_params(key, C, Hid, A, M, n_classes):
    ks = jax.random.split(key, 16)
    w = lambda k, s: (0.1 * jax.random.normal(k, s)).astype(jnp.float32)
    return {
        "t_w1": w(ks[0], (C, C // 2)),      "t_b1": w(ks[1], (1, C // 2)),
        "t_w2": w(ks[2], (C // 2, Hid)),    "t_b2": w(ks[3], (1, Hid)),
        "nl_wg": w(ks[4], (M, Hid, A)),     "nl_bg": w(ks[5], (M, 1, A)),
        "nl_wth": w(ks[6], (M, C, A)),      "nl_bth": w(ks[7], (M, 1, A)),
        "nl_wph": w(ks[8], (M, Hid, A)),    "nl_bph": w(ks[9], (M, 1, A)),
        "nl_ww": w(ks[10], (M, A, C)),      "nl_bw": w(ks[11], (M, 1, C)),
        "c_w1": w(ks[12], (2 * C, C)),      "c_b1": w(ks[13], (1, C)),
        "bn_gamma": jnp.ones((1, C), jnp.float32),
        "bn_beta": jnp.zeros((1, C), jnp.float32),
        "bn_mean": jnp.zeros((1, C), jnp.float32),
        "bn_var": jnp.ones((1, C), jnp.float32),
        "c_w2": w(ks[14], (C, n_classes)),  "c_b2": w(ks[15], (1, n_classes)),
    }


if __name__ == "__main__":
    key = jax.random.PRNGKey(0)
    B, C, H, W = 2, 32, 4, 4           # img_feat_size = 32, conv_feat_num = 16
    Hid, A = 16, 16                     # hidden_size, attfeat_size
    M, n_classes, T_text = 2, 8, 8      # num_rn_module, classes, text seq len

    k_img, k_txt, k_last, k_par = jax.random.split(key, 4)
    img_feat = jax.random.normal(k_img, (B, C, H, W), jnp.float32)
    text_feat = jax.random.normal(k_txt, (B, Hid, T_text), jnp.float32)
    text_feat_last = jax.random.normal(k_last, (B, Hid), jnp.float32)
    params = init_params(k_par, C, Hid, A, M, n_classes)
    packed = pack_params(params)

    # --- eval path: gate=False (no_text_in_test=True), the default _forward ---
    out, tloss, attention = multimodal_forward(img_feat, text_feat, text_feat_last, packed)
    out, tloss, attention = jax.block_until_ready((out, tloss, attention))
    ref_out, ref_tloss, ref_att = reference_forward(
        img_feat, text_feat, text_feat_last, params, use_text=False)
    assert out.shape == (B, n_classes) and tloss.shape == (B, Hid)
    assert attention.shape == (B, M, H * W, 1)
    assert jnp.allclose(out, ref_out, atol=1e-3, rtol=1e-3), "logits mismatch (gate=False)"
    assert jnp.allclose(tloss, ref_tloss, atol=1e-3, rtol=1e-3), "transfer_loss mismatch"
    assert jnp.allclose(attention, ref_att, atol=1e-5, rtol=1e-5), "attention mismatch (gate=False)"

    # --- eval path: gate=True (text features drive the NonLocal blocks, T>1) ---
    out2, tloss2, att2 = multimodal_forward(
        img_feat, text_feat, text_feat_last, packed, use_text=True)
    out2, tloss2, att2 = jax.block_until_ready((out2, tloss2, att2))
    ref_out2, ref_tloss2, ref_att2 = reference_forward(
        img_feat, text_feat, text_feat_last, params, use_text=True)
    assert att2.shape == (B, M, H * W, T_text)
    # slightly looser tolerance: softmax denominator uses pl.reciprocal(approx=True)
    assert jnp.allclose(out2, ref_out2, atol=5e-3, rtol=5e-3), "logits mismatch (gate=True)"
    assert jnp.allclose(tloss2, ref_tloss2, atol=1e-3, rtol=1e-3), "transfer_loss mismatch (gate=True)"
    assert jnp.allclose(att2, ref_att2, atol=5e-3, rtol=5e-3), "attention mismatch (gate=True)"

    print("KERNEL_OK")
</pallas_src>

<mosaic_0001>
module attributes {stable_mosaic.version = 11 : i64} {
  func.func @kernel(%arg0: i32, %arg1: memref<2x32x16xf32, #tpu.memory_space<vmem>>, %arg2: memref<2x16xf32, #tpu.memory_space<vmem>>, %arg3: memref<32x16xf32, #tpu.memory_space<vmem>>, %arg4: memref<1x16xf32, #tpu.memory_space<vmem>>, %arg5: memref<16x16xf32, #tpu.memory_space<vmem>>, %arg6: memref<1x16xf32, #tpu.memory_space<vmem>>, %arg7: memref<16x32xf32, #tpu.memory_space<vmem>>, %arg8: memref<1x32xf32, #tpu.memory_space<vmem>>, %arg9: memref<32x32xf32, #tpu.memory_space<vmem>>, %arg10: memref<1x32xf32, #tpu.memory_space<vmem>>, %arg11: memref<32x32xf32, #tpu.memory_space<vmem>>, %arg12: memref<32x32xf32, #tpu.memory_space<vmem>>, %arg13: memref<1x32xf32, #tpu.memory_space<vmem>>, %arg14: memref<1x32xf32, #tpu.memory_space<vmem>>, %arg15: memref<1x32xf32, #tpu.memory_space<vmem>>, %arg16: memref<1x32xf32, #tpu.memory_space<vmem>>, %arg17: memref<1x32xf32, #tpu.memory_space<vmem>>, %arg18: memref<32x8xf32, #tpu.memory_space<vmem>>, %arg19: memref<1x8xf32, #tpu.memory_space<vmem>>, %arg20: memref<2x8xf32, #tpu.memory_space<vmem>>, %arg21: memref<2x16xf32, #tpu.memory_space<vmem>>) attributes {dimension_semantics = [#tpu.dimension_semantics<arbitrary>], iteration_bounds = array<i64: 1>, scalar_prefetch = 0 : i64, scratch_operands = 0 : i64, tpu.core_type = #tpu.core_type<tc>, window_params = [{pipeline_mode = #tpu.pipeline_mode<synchronous>, transform_indices = @transform_0, window_bounds = array<i64: 2, 32, 16>}, {pipeline_mode = #tpu.pipeline_mode<synchronous>, transform_indices = @transform_1, window_bounds = array<i64: 2, 16>}, {pipeline_mode = #tpu.pipeline_mode<synchronous>, transform_indices = @transform_2, window_bounds = array<i64: 32, 16>}, {pipeline_mode = #tpu.pipeline_mode<synchronous>, transform_indices = @transform_3, window_bounds = array<i64: 1, 16>}, {pipeline_mode = #tpu.pipeline_mode<synchronous>, transform_indices = @transform_4, window_bounds = array<i64: 16, 16>}, {pipeline_mode = #tpu.pipeline_mode<synchronous>, transform_indices = @transform_5, window_bounds = array<i64: 1, 16>}, {pipeline_mode = #tpu.pipeline_mode<synchronous>, transform_indices = @transform_6, window_bounds = array<i64: 16, 32>}, {pipeline_mode = #tpu.pipeline_mode<synchronous>, transform_indices = @transform_7, window_bounds = array<i64: 1, 32>}, {pipeline_mode = #tpu.pipeline_mode<synchronous>, transform_indices = @transform_8, window_bounds = array<i64: 32, 32>}, {pipeline_mode = #tpu.pipeline_mode<synchronous>, transform_indices = @transform_9, window_bounds = array<i64: 1, 32>}, {pipeline_mode = #tpu.pipeline_mode<synchronous>, transform_indices = @transform_10, window_bounds = array<i64: 32, 32>}, {pipeline_mode = #tpu.pipeline_mode<synchronous>, transform_indices = @transform_11, window_bounds = array<i64: 32, 32>}, {pipeline_mode = #tpu.pipeline_mode<synchronous>, transform_indices = @transform_12, window_bounds = array<i64: 1, 32>}, {pipeline_mode = #tpu.pipeline_mode<synchronous>, transform_indices = @transform_13, window_bounds = array<i64: 1, 32>}, {pipeline_mode = #tpu.pipeline_mode<synchronous>, transform_indices = @transform_14, window_bounds = array<i64: 1, 32>}, {pipeline_mode = #tpu.pipeline_mode<synchronous>, transform_indices = @transform_15, window_bounds = array<i64: 1, 32>}, {pipeline_mode = #tpu.pipeline_mode<synchronous>, transform_indices = @transform_16, window_bounds = array<i64: 1, 32>}, {pipeline_mode = #tpu.pipeline_mode<synchronous>, transform_indices = @transform_17, window_bounds = array<i64: 32, 8>}, {pipeline_mode = #tpu.pipeline_mode<synchronous>, transform_indices = @transform_18, window_bounds = array<i64: 1, 8>}, {pipeline_mode = #tpu.pipeline_mode<synchronous>, transform_indices = @transform_19, window_bounds = array<i64: 2, 8>}, {pipeline_mode = #tpu.pipeline_mode<synchronous>, transform_indices = @transform_20, window_bounds = array<i64: 2, 16>}]} {
    %c0 = arith.constant 0 : index
    %c0_0 = arith.constant 0 : index
    %c0_1 = arith.constant 0 : index
    %0 = vector.load %arg1[%c0, %c0_0, %c0_1] : memref<2x32x16xf32, #tpu.memory_space<vmem>>, vector<2x32x16xf32>
    %cst = arith.constant dense<0.000000e+00> : vector<2x32xf32>
    %1 = vector.multi_reduction <add>, %0, %cst [2] : vector<2x32x16xf32> to vector<2x32xf32>
    %cst_2 = arith.constant 1.600000e+01 : f32
    %2 = vector.broadcast %cst_2 : f32 to vector<2x32xf32>
    %3 = arith.divf %1, %2 : vector<2x32xf32>
    %c0_3 = arith.constant 0 : index
    %c0_4 = arith.constant 0 : index
    %4 = vector.load %arg3[%c0_3, %c0_4] : memref<32x16xf32, #tpu.memory_space<vmem>>, vector<32x16xf32>
    %c0_5 = arith.constant 0 : index
    %c0_6 = arith.constant 0 : index
    %5 = vector.load %arg4[%c0_5, %c0_6] : memref<1x16xf32, #tpu.memory_space<vmem>>, vector<1x16xf32>
    %c0_7 = arith.constant 0 : index
    %c0_8 = arith.constant 0 : index
    %6 = vector.load %arg5[%c0_7, %c0_8] : memref<16x16xf32, #tpu.memory_space<vmem>>, vector<16x16xf32>
    %c0_9 = arith.constant 0 : index
    %c0_10 = arith.constant 0 : index
    %7 = vector.load %arg6[%c0_9, %c0_10] : memref<1x16xf32, #tpu.memory_space<vmem>>, vector<1x16xf32>
    %cst_11 = arith.constant dense<0.000000e+00> : vector<2x16xf32>
    %8 = tpu.matmul %3, %4, %cst_11 {dimension_numbers = #tpu.dot_dimension_numbers<[1], [0], [0], [1], [0, 0, 1, 1], [], []>} : vector<2x32xf32>, vector<32x16xf32>, vector<2x16xf32> -> vector<2x16xf32>
    %9 = vector.broadcast %5 : vector<1x16xf32> to vector<2x16xf32>
    %10 = arith.addf %8, %9 : vector<2x16xf32>
    %cst_12 = arith.constant 0.000000e+00 : f32
    %11 = vector.broadcast %cst_12 : f32 to vector<2x16xf32>
    %12 = arith.cmpf ogt, %10, %11 : vector<2x16xf32>
    %cst_13 = arith.constant 0.00999999977 : f32
    %13 = vector.broadcast %cst_13 : f32 to vector<2x16xf32>
    %14 = arith.mulf %13, %10 : vector<2x16xf32>
    %15 = arith.select %12, %10, %14 : vector<2x16xi1>, vector<2x16xf32>
    %cst_14 = arith.constant dense<0.000000e+00> : vector<2x16xf32>
    %16 = tpu.matmul %15, %6, %cst_14 {dimension_numbers = #tpu.dot_dimension_numbers<[1], [0], [0], [1], [0, 0, 1, 1], [], []>} : vector<2x16xf32>, vector<16x16xf32>, vector<2x16xf32> -> vector<2x16xf32>
    %17 = vector.broadcast %7 : vector<1x16xf32> to vector<2x16xf32>
    %18 = arith.addf %16, %17 : vector<2x16xf32>
    %19 = math.tanh %18 : vector<2x16xf32>
    %c0_15 = arith.constant 0 : index
    %c0_16 = arith.constant 0 : index
    %20 = vector.load %arg2[%c0_15, %c0_16] : memref<2x16xf32, #tpu.memory_space<vmem>>, vector<2x16xf32>
    %21 = arith.subf %19, %20 : vector<2x16xf32>
    %22 = arith.mulf %21, %21 : vector<2x16xf32>
    %c0_17 = arith.constant 0 : index
    %c0_18 = arith.constant 0 : index
    %23 = vector.load %arg21[%c0_17, %c0_18] : memref<2x16xf32, #tpu.memory_space<vmem>>, vector<2x16xf32>
    tpu.vector_store %arg21[%c0_17, %c0_18], %22 {strides = array<i32>} : memref<2x16xf32, #tpu.memory_space<vmem>>, vector<2x16xf32>,
    %c0_19 = arith.constant 0 : index
    %c0_20 = arith.constant 0 : index
    %24 = vector.load %arg7[%c0_19, %c0_20] : memref<16x32xf32, #tpu.memory_space<vmem>>, vector<16x32xf32>
    %cst_21 = arith.constant dense<0.000000e+00> : vector<2x32xf32>
    %25 = tpu.matmul %19, %24, %cst_21 {dimension_numbers = #tpu.dot_dimension_numbers<[1], [0], [0], [1], [0, 0, 1, 1], [], []>} : vector<2x16xf32>, vector<16x32xf32>, vector<2x32xf32> -> vector<2x32xf32>
    %c0_22 = arith.constant 0 : index
    %c0_23 = arith.constant 0 : index
    %26 = vector.load %arg8[%c0_22, %c0_23] : memref<1x32xf32, #tpu.memory_space<vmem>>, vector<1x32xf32>
    %27 = vector.broadcast %26 : vector<1x32xf32> to vector<2x32xf32>
    %28 = arith.addf %25, %27 : vector<2x32xf32>
    %c0_24 = arith.constant 0 : index
    %c0_25 = arith.constant 0 : index
    %29 = vector.load %arg9[%c0_24, %c0_25] : memref<32x32xf32, #tpu.memory_space<vmem>>, vector<32x32xf32>
    %cst_26 = arith.constant dense<0.000000e+00> : vector<2x32xf32>
    %30 = tpu.matmul %28, %29, %cst_26 {dimension_numbers = #tpu.dot_dimension_numbers<[1], [0], [0], [1], [0, 0, 1, 1], [], []>} : vector<2x32xf32>, vector<32x32xf32>, vector<2x32xf32> -> vector<2x32xf32>
    %c0_27 = arith.constant 0 : index
    %c0_28 = arith.constant 0 : index
    %31 = vector.load %arg10[%c0_27, %c0_28] : memref<1x32xf32, #tpu.memory_space<vmem>>, vector<1x32xf32>
    %32 = vector.broadcast %31 : vector<1x32xf32> to vector<2x32xf32>
    %33 = arith.addf %30, %32 : vector<2x32xf32>
    %cst_29 = arith.constant 5.000000e-01 : f32
    %34 = vector.broadcast %cst_29 : f32 to vector<2x32xf32>
    %35 = arith.mulf %33, %34 : vector<2x32xf32>
    %36 = arith.addf %3, %35 : vector<2x32xf32>
    %c0_30 = arith.constant 0 : index
    %c0_31 = arith.constant 0 : index
    %37 = vector.load %arg11[%c0_30, %c0_31] : memref<32x32xf32, #tpu.memory_space<vmem>>, vector<32x32xf32>
    %c0_32 = arith.constant 0 : index
    %c0_33 = arith.constant 0 : index
    %38 = vector.load %arg12[%c0_32, %c0_33] : memref<32x32xf32, #tpu.memory_space<vmem>>, vector<32x32xf32>
    %c0_34 = arith.constant 0 : index
    %c0_35 = arith.constant 0 : index
    %39 = vector.load %arg13[%c0_34, %c0_35] : memref<1x32xf32, #tpu.memory_space<vmem>>, vector<1x32xf32>
    %c0_36 = arith.constant 0 : index
    %c0_37 = arith.constant 0 : index
    %40 = vector.load %arg14[%c0_36, %c0_37] : memref<1x32xf32, #tpu.memory_space<vmem>>, vector<1x32xf32>
    %c0_38 = arith.constant 0 : index
    %c0_39 = arith.constant 0 : index
    %41 = vector.load %arg15[%c0_38, %c0_39] : memref<1x32xf32, #tpu.memory_space<vmem>>, vector<1x32xf32>
    %c0_40 = arith.constant 0 : index
    %c0_41 = arith.constant 0 : index
    %42 = vector.load %arg16[%c0_40, %c0_41] : memref<1x32xf32, #tpu.memory_space<vmem>>, vector<1x32xf32>
    %c0_42 = arith.constant 0 : index
    %c0_43 = arith.constant 0 : index
    %43 = vector.load %arg17[%c0_42, %c0_43] : memref<1x32xf32, #tpu.memory_space<vmem>>, vector<1x32xf32>
    %c0_44 = arith.constant 0 : index
    %c0_45 = arith.constant 0 : index
    %44 = vector.load %arg18[%c0_44, %c0_45] : memref<32x8xf32, #tpu.memory_space<vmem>>, vector<32x8xf32>
    %c0_46 = arith.constant 0 : index
    %c0_47 = arith.constant 0 : index
    %45 = vector.load %arg19[%c0_46, %c0_47] : memref<1x8xf32, #tpu.memory_space<vmem>>, vector<1x8xf32>
    %cst_48 = arith.constant dense<0.000000e+00> : vector<2x32xf32>
    %46 = tpu.matmul %3, %37, %cst_48 {dimension_numbers = #tpu.dot_dimension_numbers<[1], [0], [0], [1], [0, 0, 1, 1], [], []>} : vector<2x32xf32>, vector<32x32xf32>, vector<2x32xf32> -> vector<2x32xf32>
    %cst_49 = arith.constant dense<0.000000e+00> : vector<2x32xf32>
    %47 = tpu.matmul %36, %38, %cst_49 {dimension_numbers = #tpu.dot_dimension_numbers<[1], [0], [0], [1], [0, 0, 1, 1], [], []>} : vector<2x32xf32>, vector<32x32xf32>, vector<2x32xf32> -> vector<2x32xf32>
    %48 = arith.addf %46, %47 : vector<2x32xf32>
    %49 = vector.broadcast %39 : vector<1x32xf32> to vector<2x32xf32>
    %50 = arith.addf %48, %49 : vector<2x32xf32>
    %51 = vector.broadcast %42 : vector<1x32xf32> to vector<2x32xf32>
    %52 = arith.subf %50, %51 : vector<2x32xf32>
    %cst_50 = arith.constant 9.99999974E-6 : f32
    %53 = vector.broadcast %cst_50 : f32 to vector<1x32xf32>
    %54 = arith.addf %43, %53 : vector<1x32xf32>
    %55 = math.rsqrt %54 : vector<1x32xf32>
    %56 = vector.broadcast %55 : vector<1x32xf32> to vector<2x32xf32>
    %57 = arith.mulf %52, %56 : vector<2x32xf32>
    %58 = vector.broadcast %40 : vector<1x32xf32> to vector<2x32xf32>
    %59 = arith.mulf %57, %58 : vector<2x32xf32>
    %60 = vector.broadcast %41 : vector<1x32xf32> to vector<2x32xf32>
    %61 = arith.addf %59, %60 : vector<2x32xf32>
    %cst_51 = arith.constant 0.000000e+00 : f32
    %62 = vector.broadcast %cst_51 : f32 to vector<2x32xf32>
    %63 = arith.maximumf %61, %62 : vector<2x32xf32>
    %cst_52 = arith.constant dense<0.000000e+00> : vector<2x8xf32>
    %64 = tpu.matmul %63, %44, %cst_52 {dimension_numbers = #tpu.dot_dimension_numbers<[1], [0], [0], [1], [0, 0, 1, 1], [], []>} : vector<2x32xf32>, vector<32x8xf32>, vector<2x8xf32> -> vector<2x8xf32>
    %65 = vector.broadcast %45 : vector<1x8xf32> to vector<2x8xf32>
    %66 = arith.addf %64, %65 : vector<2x8xf32>
    %c0_53 = arith.constant 0 : index
    %c0_54 = arith.constant 0 : index
    %67 = vector.load %arg20[%c0_53, %c0_54] : memref<2x8xf32, #tpu.memory_space<vmem>>, vector<2x8xf32>
    tpu.vector_store %arg20[%c0_53, %c0_54], %66 {strides = array<i32>} : memref<2x8xf32, #tpu.memory_space<vmem>>, vector<2x8xf32>,
    return
  }
  func.func @transform_0(%arg0: i32) -> (i32, i32, i32) {
    %c0_i32 = arith.constant 0 : i32
    %c0_i32_0 = arith.constant 0 : i32
    %c0_i32_1 = arith.constant 0 : i32
    %c0_i32_2 = arith.constant 0 : i32
    return %c0_i32, %c0_i32_0, %c0_i32_1 : i32, i32, i32
  }
  func.func @transform_1(%arg0: i32) -> (i32, i32) {
    %c0_i32 = arith.constant 0 : i32
    %c0_i32_0 = arith.constant 0 : i32
    %c0_i32_1 = arith.constant 0 : i32
    return %c0_i32, %c0_i32_0 : i32, i32
  }
  func.func @transform_2(%arg0: i32) -> (i32, i32) {
    %c0_i32 = arith.constant 0 : i32
    %c0_i32_0 = arith.constant 0 : i32
    %c0_i32_1 = arith.constant 0 : i32
    return %c0_i32, %c0_i32_0 : i32, i32
  }
  func.func @transform_3(%arg0: i32) -> (i32, i32) {
    %c0_i32 = arith.constant 0 : i32
    %c0_i32_0 = arith.constant 0 : i32
    %c0_i32_1 = arith.constant 0 : i32
    return %c0_i32, %c0_i32_0 : i32, i32
  }
  func.func @transform_4(%arg0: i32) -> (i32, i32) {
    %c0_i32 = arith.constant 0 : i32
    %c0_i32_0 = arith.constant 0 : i32
    %c0_i32_1 = arith.constant 0 : i32
    return %c0_i32, %c0_i32_0 : i32, i32
  }
  func.func @transform_5(%arg0: i32) -> (i32, i32) {
    %c0_i32 = arith.constant 0 : i32
    %c0_i32_0 = arith.constant 0 : i32
    %c0_i32_1 = arith.constant 0 : i32
    return %c0_i32, %c0_i32_0 : i32, i32
  }
  func.func @transform_6(%arg0: i32) -> (i32, i32) {
    %c0_i32 = arith.constant 0 : i32
    %c0_i32_0 = arith.constant 0 : i32
    %c0_i32_1 = arith.constant 0 : i32
    return %c0_i32, %c0_i32_0 : i32, i32
  }
  func.func @transform_7(%arg0: i32) -> (i32, i32) {
    %c0_i32 = arith.constant 0 : i32
    %c0_i32_0 = arith.constant 0 : i32
    %c0_i32_1 = arith.constant 0 : i32
    return %c0_i32, %c0_i32_0 : i32, i32
  }
  func.func @transform_8(%arg0: i32) -> (i32, i32) {
    %c0_i32 = arith.constant 0 : i32
    %c0_i32_0 = arith.constant 0 : i32
    %c0_i32_1 = arith.constant 0 : i32
    return %c0_i32, %c0_i32_0 : i32, i32
  }
  func.func @transform_9(%arg0: i32) -> (i32, i32) {
    %c0_i32 = arith.constant 0 : i32
    %c0_i32_0 = arith.constant 0 : i32
    %c0_i32_1 = arith.constant 0 : i32
    return %c0_i32, %c0_i32_0 : i32, i32
  }
  func.func @transform_10(%arg0: i32) -> (i32, i32) {
    %c0_i32 = arith.constant 0 : i32
    %c0_i32_0 = arith.constant 0 : i32
    %c0_i32_1 = arith.constant 0 : i32
    return %c0_i32, %c0_i32_0 : i32, i32
  }
  func.func @transform_11(%arg0: i32) -> (i32, i32) {
    %c0_i32 = arith.constant 0 : i32
    %c0_i32_0 = arith.constant 0 : i32
    %c0_i32_1 = arith.constant 0 : i32
    return %c0_i32, %c0_i32_0 : i32, i32
  }
  func.func @transform_12(%arg0: i32) -> (i32, i32) {
    %c0_i32 = arith.constant 0 : i32
    %c0_i32_0 = arith.constant 0 : i32
    %c0_i32_1 = arith.constant 0 : i32
    return %c0_i32, %c0_i32_0 : i32, i32
  }
  func.func @transform_13(%arg0: i32) -> (i32, i32) {
    %c0_i32 = arith.constant 0 : i32
    %c0_i32_0 = arith.constant 0 : i32
    %c0_i32_1 = arith.constant 0 : i32
    return %c0_i32, %c0_i32_0 : i32, i32
  }
  func.func @transform_14(%arg0: i32) -> (i32, i32) {
    %c0_i32 = arith.constant 0 : i32
    %c0_i32_0 = arith.constant 0 : i32
    %c0_i32_1 = arith.constant 0 : i32
    return %c0_i32, %c0_i32_0 : i32, i32
  }
  func.func @transform_15(%arg0: i32) -> (i32, i32) {
    %c0_i32 = arith.constant 0 : i32
    %c0_i32_0 = arith.constant 0 : i32
    %c0_i32_1 = arith.constant 0 : i32
    return %c0_i32, %c0_i32_0 : i32, i32
  }
  func.func @transform_16(%arg0: i32) -> (i32, i32) {
    %c0_i32 = arith.constant 0 : i32
    %c0_i32_0 = arith.constant 0 : i32
    %c0_i32_1 = arith.constant 0 : i32
    return %c0_i32, %c0_i32_0 : i32, i32
  }
  func.func @transform_17(%arg0: i32) -> (i32, i32) {
    %c0_i32 = arith.constant 0 : i32
    %c0_i32_0 = arith.constant 0 : i32
    %c0_i32_1 = arith.constant 0 : i32
    return %c0_i32, %c0_i32_0 : i32, i32
  }
  func.func @transform_18(%arg0: i32) -> (i32, i32) {
    %c0_i32 = arith.constant 0 : i32
    %c0_i32_0 = arith.constant 0 : i32
    %c0_i32_1 = arith.constant 0 : i32
    return %c0_i32, %c0_i32_0 : i32, i32
  }
  func.func @transform_19(%arg0: i32) -> (i32, i32) {
    %c0_i32 = arith.constant 0 : i32
    %c0_i32_0 = arith.constant 0 : i32
    %c0_i32_1 = arith.constant 0 : i32
    return %c0_i32, %c0_i32_0 : i32, i32
  }
  func.func @transform_20(%arg0: i32) -> (i32, i32) {
    %c0_i32 = arith.constant 0 : i32
    %c0_i32_0 = arith.constant 0 : i32
    %c0_i32_1 = arith.constant 0 : i32
    return %c0_i32, %c0_i32_0 : i32, i32
  }
}

</mosaic_0001>

<llo_original>
// kernel: tpu_custom_call.1
$region0: #{tpu_custom_call.1}
  #allocation0 [shape = 'u32[]', space=smem, size = 0x4, offset = 0x4, fixed_abs, tag = 'smem constant byte address 0x4 - core index']
  #allocation1 [shape = 'u32[72,128]{1,0:T(1,128)}', space=vmem, size = 0x9000, scoped, tag = 'internal scratch']
  %s0 = inlined_call_operand.vmem [shape: f32[2,32,16], index: 0, kind: input, shape index: {}]
  %s1 = inlined_call_operand.vmem [shape: f32[2,16], index: 1, kind: input, shape index: {}]
  %s2 = inlined_call_operand.vmem [shape: f32[32,16], index: 2, kind: input, shape index: {}]
  %s3 = inlined_call_operand.vmem [shape: f32[1,16], index: 3, kind: input, shape index: {}]
  %s4 = inlined_call_operand.vmem [shape: f32[16,16], index: 4, kind: input, shape index: {}]
  %s5 = inlined_call_operand.vmem [shape: f32[1,16], index: 5, kind: input, shape index: {}]
  %s6 = inlined_call_operand.vmem [shape: f32[16,32], index: 6, kind: input, shape index: {}]
  %s7 = inlined_call_operand.vmem [shape: f32[1,32], index: 7, kind: input, shape index: {}]
  %s8 = inlined_call_operand.vmem [shape: f32[32,32], index: 8, kind: input, shape index: {}]
  %s9 = inlined_call_operand.vmem [shape: f32[1,32], index: 9, kind: input, shape index: {}]
  %s10 = inlined_call_operand.vmem [shape: f32[32,32], index: 10, kind: input, shape index: {}]
  %s11 = inlined_call_operand.vmem [shape: f32[32,32], index: 11, kind: input, shape index: {}]
  %s12 = inlined_call_operand.vmem [shape: f32[1,32], index: 12, kind: input, shape index: {}]
  %s13 = inlined_call_operand.vmem [shape: f32[1,32], index: 13, kind: input, shape index: {}]
  %s14 = inlined_call_operand.vmem [shape: f32[1,32], index: 14, kind: input, shape index: {}]
  %s15 = inlined_call_operand.vmem [shape: f32[1,32], index: 15, kind: input, shape index: {}]
  %s16 = inlined_call_operand.vmem [shape: f32[1,32], index: 16, kind: input, shape index: {}]
  %s17 = inlined_call_operand.vmem [shape: f32[32,8], index: 17, kind: input, shape index: {}]
  %s18 = inlined_call_operand.vmem [shape: f32[1,8], index: 18, kind: input, shape index: {}]
  %s19 = inlined_call_operand.hbm [shape: f32[2,8], index: 19, kind: output, shape index: {0}]
  %s20 = inlined_call_operand.hbm [shape: f32[2,16], index: 20, kind: output, shape index: {1}]
  %21 = xla_tuple %s19, %s20
  %s22 = sld [smem:[#allocation0]]
  $region94: #{tpu_custom_call.1} parent=0
    _
  %s24 = ssub.s32 1, %s22
  %s25 = scalar_select 0, %s24, %s22
  $region1: #{tpu_custom_call.1} parent=0
    #allocation2 [shape = 'u8[1024]{0}', space=vmem, size = 0x400, scoped, tag = 'output window, operand 0, single buffered']
    #allocation3 [shape = 's32[1]{0}', space=sflag, size = 0x4, scoped, tag = 'scoped memory for tpu_custom_call.1']
    #allocation4 [shape = 'u8[1024]{0}', space=vmem, size = 0x400, scoped, tag = 'output window, operand 1, single buffered']
    #allocation5 [shape = 's32[1]{0}', space=sflag, size = 0x4, scoped, tag = 'scoped memory for tpu_custom_call.1']
    %26 = vsyncpa [#allocation3], 0
    %27 = vsyncpa [#allocation5], 0
    // Predicated region
    $region2: #{tpu_custom_call.1} parent=1 // pred_check
      _
    $region3: #{tpu_custom_call.1} parent=1 // pred_check_branch
      %29 = sbr.rel (0) target = $region5
    $region4: #{tpu_custom_call.1} parent=1 // pred_region
      _
    $region5: #{tpu_custom_call.1} parent=1 // pred_fallthru
      _
    // Predicated region
    $region6: #{tpu_custom_call.1} parent=1 // pred_check
      _
    $region7: #{tpu_custom_call.1} parent=1 // pred_check_branch
      %31 = sbr.rel (0) target = $region9
    $region8: #{tpu_custom_call.1} parent=1 // pred_region
      _
    $region9: #{tpu_custom_call.1} parent=1 // pred_fallthru
      _
    // Predicated region
    $region10: #{tpu_custom_call.1} parent=1 // pred_check
      _
    $region11: #{tpu_custom_call.1} parent=1 // pred_check_branch
      %33 = sbr.rel (0) target = $region13
    $region12: #{tpu_custom_call.1} parent=1 // pred_region
      _
    $region13: #{tpu_custom_call.1} parent=1 // pred_fallthru
      _
    // Predicated region
    $region14: #{tpu_custom_call.1} parent=1 // pred_check
      _
    $region15: #{tpu_custom_call.1} parent=1 // pred_check_branch
      %35 = sbr.rel (0) target = $region17
    $region16: #{tpu_custom_call.1} parent=1 // pred_region
      _
    $region17: #{tpu_custom_call.1} parent=1 // pred_fallthru
      _
    // Predicated region
    $region18: #{tpu_custom_call.1} parent=1 // pred_check
      _
    $region19: #{tpu_custom_call.1} parent=1 // pred_check_branch
      %37 = sbr.rel (0) target = $region21
    $region20: #{tpu_custom_call.1} parent=1 // pred_region
      _
    $region21: #{tpu_custom_call.1} parent=1 // pred_fallthru
      _
    // Predicated region
    $region22: #{tpu_custom_call.1} parent=1 // pred_check
      _
    $region23: #{tpu_custom_call.1} parent=1 // pred_check_branch
      %39 = sbr.rel (0) target = $region25
    $region24: #{tpu_custom_call.1} parent=1 // pred_region
      _
    $region25: #{tpu_custom_call.1} parent=1 // pred_fallthru
      _
    // Predicated region
    $region26: #{tpu_custom_call.1} parent=1 // pred_check
      _
    $region27: #{tpu_custom_call.1} parent=1 // pred_check_branch
      %41 = sbr.rel (0) target = $region29
    $region28: #{tpu_custom_call.1} parent=1 // pred_region
      _
    $region29: #{tpu_custom_call.1} parent=1 // pred_fallthru
      _
    // Predicated region
    $region30: #{tpu_custom_call.1} parent=1 // pred_check
      _
    $region31: #{tpu_custom_call.1} parent=1 // pred_check_branch
      %43 = sbr.rel (0) target = $region33
    $region32: #{tpu_custom_call.1} parent=1 // pred_region
      _
    $region33: #{tpu_custom_call.1} parent=1 // pred_fallthru
      _
    // Predicated region
    $region34: #{tpu_custom_call.1} parent=1 // pred_check
      _
    $region35: #{tpu_custom_call.1} parent=1 // pred_check_branch
      %45 = sbr.rel (0) target = $region37
    $region36: #{tpu_custom_call.1} parent=1 // pred_region
      _
    $region37: #{tpu_custom_call.1} parent=1 // pred_fallthru
      _
    // Predicated region
    $region38: #{tpu_custom_call.1} parent=1 // pred_check
      _
    $region39: #{tpu_custom_call.1} parent=1 // pred_check_branch
      %47 = sbr.rel (0) target = $region41
    $region40: #{tpu_custom_call.1} parent=1 // pred_region
      _
    $region41: #{tpu_custom_call.1} parent=1 // pred_fallthru
      _
    // Predicated region
    $region42: #{tpu_custom_call.1} parent=1 // pred_check
      _
    $region43: #{tpu_custom_call.1} parent=1 // pred_check_branch
      %49 = sbr.rel (0) target = $region45
    $region44: #{tpu_custom_call.1} parent=1 // pred_region
      _
    $region45: #{tpu_custom_call.1} parent=1 // pred_fallthru
      _
    // Predicated region
    $region46: #{tpu_custom_call.1} parent=1 // pred_check
      _
    $region47: #{tpu_custom_call.1} parent=1 // pred_check_branch
      %51 = sbr.rel (0) target = $region49
    $region48: #{tpu_custom_call.1} parent=1 // pred_region
      _
    $region49: #{tpu_custom_call.1} parent=1 // pred_fallthru
      _
    // Predicated region
    $region50: #{tpu_custom_call.1} parent=1 // pred_check
      _
    $region51: #{tpu_custom_call.1} parent=1 // pred_check_branch
      %53 = sbr.rel (0) target = $region53
    $region52: #{tpu_custom_call.1} parent=1 // pred_region
      _
    $region53: #{tpu_custom_call.1} parent=1 // pred_fallthru
      _
    // Predicated region
    $region54: #{tpu_custom_call.1} parent=1 // pred_check
      _
    $region55: #{tpu_custom_call.1} parent=1 // pred_check_branch
      %55 = sbr.rel (0) target = $region57
    $region56: #{tpu_custom_call.1} parent=1 // pred_region
      _
    $region57: #{tpu_custom_call.1} parent=1 // pred_fallthru
      _
    // Predicated region
    $region58: #{tpu_custom_call.1} parent=1 // pred_check
      _
    $region59: #{tpu_custom_call.1} parent=1 // pred_check_branch
      %57 = sbr.rel (0) target = $region61
    $region60: #{tpu_custom_call.1} parent=1 // pred_region
      _
    $region61: #{tpu_custom_call.1} parent=1 // pred_fallthru
      _
    // Predicated region
    $region62: #{tpu_custom_call.1} parent=1 // pred_check
      _
    $region63: #{tpu_custom_call.1} parent=1 // pred_check_branch
      %59 = sbr.rel (0) target = $region65
    $region64: #{tpu_custom_call.1} parent=1 // pred_region
      _
    $region65: #{tpu_custom_call.1} parent=1 // pred_fallthru
      _
    // Predicated region
    $region66: #{tpu_custom_call.1} parent=1 // pred_check
      _
    $region67: #{tpu_custom_call.1} parent=1 // pred_check_branch
      %61 = sbr.rel (0) target = $region69
    $region68: #{tpu_custom_call.1} parent=1 // pred_region
      _
    $region69: #{tpu_custom_call.1} parent=1 // pred_fallthru
      _
    // Predicated region
    $region70: #{tpu_custom_call.1} parent=1 // pred_check
      _
    $region71: #{tpu_custom_call.1} parent=1 // pred_check_branch
      %63 = sbr.rel (0) target = $region73
    $region72: #{tpu_custom_call.1} parent=1 // pred_region
      _
    $region73: #{tpu_custom_call.1} parent=1 // pred_fallthru
      _
    // Predicated region
    $region74: #{tpu_custom_call.1} parent=1 // pred_check
      _
    $region75: #{tpu_custom_call.1} parent=1 // pred_check_branch
      %65 = sbr.rel (0) target = $region77
    $region76: #{tpu_custom_call.1} parent=1 // pred_region
      _
    $region77: #{tpu_custom_call.1} parent=1 // pred_fallthru
      _
    %v66 = vld [vmem:[%s0] sm:$0xff]
    %v67 = vld [vmem:[%s0 + $0x8] sm:$0xff]
    %v68 = vld [vmem:[%s0 + $0x10] sm:$0xff]
    %v69 = vld [vmem:[%s0 + $0x18] sm:$0xff]
    %v70 = vld [vmem:[%s0 + $0x20] sm:$0xff]
    %v71 = vld [vmem:[%s0 + $0x28] sm:$0xff]
    %v72 = vld [vmem:[%s0 + $0x30] sm:$0xff]
    %v73 = vld [vmem:[%s0 + $0x38] sm:$0xff]
    %vm74 = vcmask 130048
    %v75 = vsel %vm74, %v66, 0.0
    %76 = vadd.xlane.f32.xlu0 %v75
    %v77 = vpop.xlane.xlu0 %76
    %v78 = vsel %vm74, %v67, 0.0
    %79 = vadd.xlane.f32.xlu0 %v78
    %v80 = vpop.xlane.xlu0 %79
    %v81 = vsel %vm74, %v68, 0.0
    %82 = vadd.xlane.f32.xlu0 %v81
    %v83 = vpop.xlane.xlu0 %82
    %v84 = vsel %vm74, %v69, 0.0
    %85 = vadd.xlane.f32.xlu0 %v84
    %v86 = vpop.xlane.xlu0 %85
    %v87 = vsel %vm74, %v70, 0.0
    %88 = vadd.xlane.f32.xlu0 %v87
    %v89 = vpop.xlane.xlu0 %88
    %v90 = vsel %vm74, %v71, 0.0
    %91 = vadd.xlane.f32.xlu0 %v90
    %v92 = vpop.xlane.xlu0 %91
    %v93 = vsel %vm74, %v72, 0.0
    %94 = vadd.xlane.f32.xlu0 %v93
    %v95 = vpop.xlane.xlu0 %94
    %v96 = vsel %vm74, %v73, 0.0
    %97 = vadd.xlane.f32.xlu0 %v96
    %v98 = vpop.xlane.xlu0 %97
    %v99 = vrcp.pop 16.0
    %v100 = vmul.f32 16.0, %v99
    %v101 = vsub.f32 1.0, %v100
    %v102 = vmul.f32 %v99, %v101
    %v103 = vadd.f32 %v99, %v102
    %vm104 = vweird.f32 %v99
    %v105 = vsel %vm104, %v99, %v103
    %v106 = vmul.f32 %v77, %v105
    %v107 = vmul.f32 %v80, %v105
    %v108 = vmul.f32 %v83, %v105
    %v109 = vmul.f32 %v86, %v105
    %v110 = vmul.f32 %v89, %v105
    %v111 = vmul.f32 %v92, %v105
    %v112 = vmul.f32 %v95, %v105
    %v113 = vmul.f32 %v98, %v105
    %v114 = vld [vmem:[%s2] sm:$0xff]
    %v115 = vld [vmem:[%s2 + $0x8] sm:$0xff]
    %v116 = vld [vmem:[%s2 + $0x10] sm:$0xff]
    %v117 = vld [vmem:[%s2 + $0x18] sm:$0xff]
    %v118 = vld [vmem:[%s3] sm:$0x1]
    %v119 = vld [vmem:[%s4] sm:$0xff]
    %v120 = vld [vmem:[%s4 + $0x8] sm:$0xff]
    %v121 = vld [vmem:[%s5] sm:$0x1]
    %v123 = vperm.slane %v118, 0
    %v133 = vlaneseq
    %v134 = vand.u32 %v133, 127
    %v135 = vperm.slane %v106, %v134
    %v136 = vadd.s32 %v134, 4294967288
    %v137 = vperm.slane %v107, %v136
    %vm138 = vcmask 130112
    %v139 = vsel %vm138, %v137, %v135
    %v140 = vadd.s32 %v134, 4294967280
    %v141 = vperm.slane %v108, %v140
    %vm142 = vcmask 195712
    %v143 = vsel %vm142, %v141, %v139
    %v144 = vadd.s32 %v134, 4294967272
    %v145 = vperm.slane %v109, %v144
    %vm146 = vcmask 261312
    %v147 = vsel %vm146, %v145, %v143
    %v148 = vperm.slane %v110, %v134
    %v149 = vperm.slane %v111, %v136
    %v150 = vsel %vm138, %v149, %v148
    %v151 = vperm.slane %v112, %v140
    %v152 = vsel %vm142, %v151, %v150
    %v153 = vperm.slane %v113, %v144
    %v154 = vsel %vm146, %v153, %v152
    %vm155 = vcmask 1041409
    %v156 = vsel %vm155, %v154, %v147
    %vm157 = vcmask 261120
    %v158 = vsel %vm157, %v156, 0
    %160 = vmatpush.msra.mxu0 0.0
    %161 = vmatpush.msra.mxu0 0.0
    %162 = vmatpush.msra.mxu0 0.0
    %163 = vmatpush.msra.mxu0 0.0
    %164 = vmatpush.msra.mxu0 0.0
    %165 = vmatpush.msra.mxu0 0.0
    %166 = vmatpush.msra.mxu0 0.0
    %167 = vmatpush.msra.mxu0 0.0
    %168 = vmatpush.msra.mxu0 0.0
    %169 = vmatpush.msra.mxu0 0.0
    %170 = vmatpush.msra.mxu0 0.0
    %171 = vmatpush.msra.mxu0 0.0
    %172 = vmatpush.msra.mxu0 %v117
    %173 = vmatpush.msra.mxu0 %v116
    %174 = vmatpush.msra.mxu0 %v115
    %175 = vmatpush.msra.mxu0 %v114
    %176 = vmatmul.f32.gmra.mxu0 %v158
    %v177 = vpop.f32.mrf.mxu0
    %v178 = vadd.f32 %v123, %v177
    %179 = vdwg.mxu0
    %vm180 = vcmp.gt.f32.partialorder %v178, 0.0
    %v181 = vmul.f32 %v178, 0.01
    %v182 = vsel %vm180, %v178, %v181
    %v184 = vperm.slane %v121, 0
    %v187 = vsel %vm74, %v182, 0
    %189 = vmatpush.msra.mxu0 0.0
    %190 = vmatpush.msra.mxu0 0.0
    %191 = vmatpush.msra.mxu0 0.0
    %192 = vmatpush.msra.mxu0 0.0
    %193 = vmatpush.msra.mxu0 0.0
    %194 = vmatpush.msra.mxu0 0.0
    %195 = vmatpush.msra.mxu0 0.0
    %196 = vmatpush.msra.mxu0 0.0
    %197 = vmatpush.msra.mxu0 0.0
    %198 = vmatpush.msra.mxu0 0.0
    %199 = vmatpush.msra.mxu0 0.0
    %200 = vmatpush.msra.mxu0 0.0
    %201 = vmatpush.msra.mxu0 0.0
    %202 = vmatpush.msra.mxu0 0.0
    %203 = vmatpush.msra.mxu0 %v120
    %204 = vmatpush.msra.mxu0 %v119
    %205 = vmatmul.f32.gmra.mxu0 %v187
    %v206 = vpop.f32.mrf.mxu0
    %v207 = vadd.f32 %v184, %v206
    %208 = vdwg.mxu0
    %v209 = vtanh.pop %v207
    %v210 = vld [vmem:[%s1] sm:$0x3]
    %v211 = vsub.f32 %v209, %v210
    %v212 = vmul.f32 %v211, %v211
    %vm213 = vcmask 123904
    %214 = vst.msk [vmem:[#allocation4] sm:$0x3] %vm213, %v212
    %v215 = vld [vmem:[%s6] sm:$0xff]
    %v216 = vld [vmem:[%s6 + $0x8] sm:$0xff]
    %v217 = vld [vmem:[%s7] sm:$0x1]
    %v219 = vperm.slane %v217, 0
    %v222 = vsel %vm74, %v209, 0
    %224 = vmatpush.msra.mxu0 0.0
    %225 = vmatpush.msra.mxu0 0.0
    %226 = vmatpush.msra.mxu0 0.0
    %227 = vmatpush.msra.mxu0 0.0
    %228 = vmatpush.msra.mxu0 0.0
    %229 = vmatpush.msra.mxu0 0.0
    %230 = vmatpush.msra.mxu0 0.0
    %231 = vmatpush.msra.mxu0 0.0
    %232 = vmatpush.msra.mxu0 0.0
    %233 = vmatpush.msra.mxu0 0.0
    %234 = vmatpush.msra.mxu0 0.0
    %235 = vmatpush.msra.mxu0 0.0
    %236 = vmatpush.msra.mxu0 0.0
    %237 = vmatpush.msra.mxu0 0.0
    %238 = vmatpush.msra.mxu0 %v216
    %239 = vmatpush.msra.mxu0 %v215
    %240 = vmatmul.f32.gmra.mxu0 %v222
    %v241 = vpop.f32.mrf.mxu0
    %v242 = vadd.f32 %v219, %v241
    %243 = vdwg.mxu0
    %v244 = vld [vmem:[%s8] sm:$0xff]
    %v245 = vld [vmem:[%s8 + $0x8] sm:$0xff]
    %v246 = vld [vmem:[%s8 + $0x10] sm:$0xff]
    %v247 = vld [vmem:[%s8 + $0x18] sm:$0xff]
    %v248 = vld [vmem:[%s9] sm:$0x1]
    %v250 = vperm.slane %v248, 0
    %v253 = vsel %vm157, %v242, 0
    %255 = vmatpush.msra.mxu0 0.0
    %256 = vmatpush.msra.mxu0 0.0
    %257 = vmatpush.msra.mxu0 0.0
    %258 = vmatpush.msra.mxu0 0.0
    %259 = vmatpush.msra.mxu0 0.0
    %260 = vmatpush.msra.mxu0 0.0
    %261 = vmatpush.msra.mxu0 0.0
    %262 = vmatpush.msra.mxu0 0.0
    %263 = vmatpush.msra.mxu0 0.0
    %264 = vmatpush.msra.mxu0 0.0
    %265 = vmatpush.msra.mxu0 0.0
    %266 = vmatpush.msra.mxu0 0.0
    %267 = vmatpush.msra.mxu0 %v247
    %268 = vmatpush.msra.mxu0 %v246
    %269 = vmatpush.msra.mxu0 %v245
    %270 = vmatpush.msra.mxu0 %v244
    %271 = vmatmul.f32.gmra.mxu0 %v253
    %v272 = vpop.f32.mrf.mxu0
    %v273 = vadd.f32 %v250, %v272
    %274 = vdwg.mxu0
    %v275 = vmul.f32 %v273, 0.5
    %v277 = vperm.slane %v275, 0
    %v278 = vlaneseq
    %v279 = vshrl.u32 %v278, 7
    %281 = vset.pattern.permute.xlu0 %v279
    %282 = vperm.xlu0 %281, %v277
    %v283 = vpop.permute.xlu0 %282
    %v284 = vlaneseq
    %v285 = vshrl.u32 %v284, 7
    %v286 = vadd.s32 %v285, 8
    %287 = vset.pattern.permute.xlu0 %v286
    %288 = vperm.xlu0 %287, %v277
    %v289 = vpop.permute.xlu0 %288
    %v290 = vlaneseq
    %v291 = vshrl.u32 %v290, 7
    %v292 = vadd.s32 %v291, 16
    %293 = vset.pattern.permute.xlu0 %v292
    %294 = vperm.xlu0 %293, %v277
    %v295 = vpop.permute.xlu0 %294
    %v296 = vlaneseq
    %v297 = vshrl.u32 %v296, 7
    %v298 = vadd.s32 %v297, 24
    %299 = vset.pattern.permute.xlu0 %v298
    %300 = vperm.xlu0 %299, %v277
    %v301 = vpop.permute.xlu0 %300
    %v302 = vperm.slane %v275, 1
    %v303 = vlaneseq
    %v304 = vshrl.u32 %v303, 7
    %306 = vset.pattern.permute.xlu0 %v304
    %307 = vperm.xlu0 %306, %v302
    %v308 = vpop.permute.xlu0 %307
    %v309 = vlaneseq
    %v310 = vshrl.u32 %v309, 7
    %v311 = vadd.s32 %v310, 8
    %312 = vset.pattern.permute.xlu0 %v311
    %313 = vperm.xlu0 %312, %v302
    %v314 = vpop.permute.xlu0 %313
    %v315 = vlaneseq
    %v316 = vshrl.u32 %v315, 7
    %v317 = vadd.s32 %v316, 16
    %318 = vset.pattern.permute.xlu0 %v317
    %319 = vperm.xlu0 %318, %v302
    %v320 = vpop.permute.xlu0 %319
    %v321 = vlaneseq
    %v322 = vshrl.u32 %v321, 7
    %v323 = vadd.s32 %v322, 24
    %324 = vset.pattern.permute.xlu0 %v323
    %325 = vperm.xlu0 %324, %v302
    %v326 = vpop.permute.xlu0 %325
    %v335 = vadd.f32 %v106, %v283
    %v336 = vadd.f32 %v107, %v289
    %v337 = vadd.f32 %v108, %v295
    %v338 = vadd.f32 %v109, %v301
    %v339 = vadd.f32 %v110, %v308
    %v340 = vadd.f32 %v111, %v314
    %v341 = vadd.f32 %v112, %v320
    %v342 = vadd.f32 %v113, %v326
    %v343 = vld [vmem:[%s10] sm:$0xff]
    %v344 = vld [vmem:[%s10 + $0x8] sm:$0xff]
    %v345 = vld [vmem:[%s10 + $0x10] sm:$0xff]
    %v346 = vld [vmem:[%s10 + $0x18] sm:$0xff]
    %v347 = vld [vmem:[%s11] sm:$0xff]
    %v348 = vld [vmem:[%s11 + $0x8] sm:$0xff]
    %v349 = vld [vmem:[%s11 + $0x10] sm:$0xff]
    %v350 = vld [vmem:[%s11 + $0x18] sm:$0xff]
    %v351 = vld [vmem:[%s12] sm:$0x1]
    %v352 = vld [vmem:[%s13] sm:$0x1]
    %v353 = vld [vmem:[%s14] sm:$0x1]
    %v354 = vld [vmem:[%s15] sm:$0x1]
    %v355 = vld [vmem:[%s16] sm:$0x1]
    %v356 = vld [vmem:[%s17] sm:$0xff]
    %v357 = vld [vmem:[%s17 + $0x8] sm:$0xff]
    %v358 = vld [vmem:[%s17 + $0x10] sm:$0xff]
    %v359 = vld [vmem:[%s17 + $0x18] sm:$0xff]
    %v360 = vld [vmem:[%s18] sm:$0x1]
    %369 = vset.pattern.permute.xlu0 0
    %370 = vperm.xlu0 %369, %v335
    %v371 = vpop.permute.xlu0 %370
    %372 = vset.pattern.permute.xlu0 0
    %373 = vperm.xlu0 %372, %v336
    %v374 = vpop.permute.xlu0 %373
    %375 = vset.pattern.permute.xlu0 0
    %376 = vperm.xlu0 %375, %v337
    %v377 = vpop.permute.xlu0 %376
    %378 = vset.pattern.permute.xlu0 0
    %379 = vperm.xlu0 %378, %v338
    %v380 = vpop.permute.xlu0 %379
    %381 = vset.pattern.permute.xlu0 0
    %382 = vperm.xlu0 %381, %v339
    %v383 = vpop.permute.xlu0 %382
    %384 = vset.pattern.permute.xlu0 0
    %385 = vperm.xlu0 %384, %v340
    %v386 = vpop.permute.xlu0 %385
    %387 = vset.pattern.permute.xlu0 0
    %388 = vperm.xlu0 %387, %v341
    %v389 = vpop.permute.xlu0 %388
    %390 = vset.pattern.permute.xlu0 0
    %391 = vperm.xlu0 %390, %v342
    %v392 = vpop.permute.xlu0 %391
    %v393 = vperm.slane %v371, %v134
    %v394 = vperm.slane %v374, %v136
    %v395 = vsel %vm138, %v394, %v393
    %v396 = vperm.slane %v377, %v140
    %v397 = vsel %vm142, %v396, %v395
    %v398 = vperm.slane %v380, %v144
    %v399 = vsel %vm146, %v398, %v397
    %v400 = vperm.slane %v383, %v134
    %v401 = vperm.slane %v386, %v136
    %v402 = vsel %vm138, %v401, %v400
    %v403 = vperm.slane %v389, %v140
    %v404 = vsel %vm142, %v403, %v402
    %v405 = vperm.slane %v392, %v144
    %v406 = vsel %vm146, %v405, %v404
    %v407 = vsel %vm155, %v406, %v399
    %v408 = vsel %vm157, %v407, 0
    %410 = vmatpush.msra.mxu0 0.0
    %411 = vmatpush.msra.mxu0 0.0
    %412 = vmatpush.msra.mxu0 0.0
    %413 = vmatpush.msra.mxu0 0.0
    %414 = vmatpush.msra.mxu0 0.0
    %415 = vmatpush.msra.mxu0 0.0
    %416 = vmatpush.msra.mxu0 0.0
    %417 = vmatpush.msra.mxu0 0.0
    %418 = vmatpush.msra.mxu0 0.0
    %419 = vmatpush.msra.mxu0 0.0
    %420 = vmatpush.msra.mxu0 0.0
    %421 = vmatpush.msra.mxu0 0.0
    %422 = vmatpush.msra.mxu0 %v350
    %423 = vmatpush.msra.mxu0 %v349
    %424 = vmatpush.msra.mxu0 %v348
    %425 = vmatpush.msra.mxu0 %v347
    %426 = vmatmul.f32.gmra.mxu0 %v408
    %v427 = vpop.f32.mrf.mxu0
    %v428 = vadd.f32 0.0, %v427
    %429 = vdwg.mxu0
    %430 = vmatpush.msra.mxu0 0.0
    %431 = vmatpush.msra.mxu0 0.0
    %432 = vmatpush.msra.mxu0 0.0
    %433 = vmatpush.msra.mxu0 0.0
    %434 = vmatpush.msra.mxu0 0.0
    %435 = vmatpush.msra.mxu0 0.0
    %436 = vmatpush.msra.mxu0 0.0
    %437 = vmatpush.msra.mxu0 0.0
    %438 = vmatpush.msra.mxu0 0.0
    %439 = vmatpush.msra.mxu0 0.0
    %440 = vmatpush.msra.mxu0 0.0
    %441 = vmatpush.msra.mxu0 0.0
    %442 = vmatpush.msra.mxu0 %v346
    %443 = vmatpush.msra.mxu0 %v345
    %444 = vmatpush.msra.mxu0 %v344
    %445 = vmatpush.msra.mxu0 %v343
    %446 = vmatmul.f32.gmra.mxu0 %v158
    %v447 = vpop.f32.mrf.mxu0
    %v448 = vadd.f32 %v428, %v447
    %449 = vdwg.mxu0
    %v451 = vperm.slane %v351, 0
    %v453 = vadd.f32 %v448, %v451
    %v455 = vperm.slane %v354, 0
    %v457 = vsub.f32 %v453, %v455
    %v458 = vadd.f32 %v355, 1e-05
    %v459 = vrsqrt.pop %v458
    %v460 = vmul.f32 %v459, %v458
    %v461 = vmul.f32 %v460, %v459
    %v462 = vmul.f32 0.5, %v461
    %v463 = vsub.f32 1.5, %v462
    %v464 = vmul.f32 %v459, %v463
    %vm465 = vweird.f32 %v458
    %vm466 = vweird.f32 %v459
    %vm467 = vmor %vm465, %vm466
    %v468 = vsel %vm467, %v459, %v464
    %v470 = vperm.slane %v468, 0
    %v472 = vmul.f32 %v457, %v470
    %v474 = vperm.slane %v352, 0
    %v476 = vmul.f32 %v472, %v474
    %v478 = vperm.slane %v353, 0
    %v480 = vadd.f32 %v476, %v478
    %v481 = vmax.f32 %v480, 0.0
    %v483 = vperm.slane %v360, 0
    %v486 = vsel %vm157, %v481, 0
    %488 = vmatpush.msra.mxu0 0.0
    %489 = vmatpush.msra.mxu0 0.0
    %490 = vmatpush.msra.mxu0 0.0
    %491 = vmatpush.msra.mxu0 0.0
    %492 = vmatpush.msra.mxu0 0.0
    %493 = vmatpush.msra.mxu0 0.0
    %494 = vmatpush.msra.mxu0 0.0
    %495 = vmatpush.msra.mxu0 0.0
    %496 = vmatpush.msra.mxu0 0.0
    %497 = vmatpush.msra.mxu0 0.0
    %498 = vmatpush.msra.mxu0 0.0
    %499 = vmatpush.msra.mxu0 0.0
    %500 = vmatpush.msra.mxu0 %v359
    %501 = vmatpush.msra.mxu0 %v358
    %502 = vmatpush.msra.mxu0 %v357
    %503 = vmatpush.msra.mxu0 %v356
    %504 = vmatmul.f32.gmra.mxu0 %v486
    %v505 = vpop.f32.mrf.mxu0
    %v506 = vadd.f32 %v483, %v505
    %507 = vdwg.mxu0
    %vm508 = vcmask 58368
    %509 = vst.msk [vmem:[#allocation2] sm:$0x3] %vm508, %v506
    // Predicated region
    $region78: #{tpu_custom_call.1} parent=1 // pred_check
      _
    $region79: #{tpu_custom_call.1} parent=1 // pred_check_branch
      %511 = sbr.rel (0) target = $region81
    $region80: #{tpu_custom_call.1} parent=1 // pred_region
      %513 = vsyncadd [#allocation3], 0
      %s515 = sshll.u32 [#allocation2], 4
      %s516 = int_to_ptr.vmem [resolvable:$true] %s515
      %s517 = sshll.u32 %s19, 4
      %s518 = int_to_ptr.hbm [resolvable:$true] %s517
      %520 = dma.vmem_to_hbm [thread:$0]  %s516, 32, %s518, [#allocation3]
    $region81: #{tpu_custom_call.1} parent=1 // pred_fallthru
      _
    // Predicated region
    $region82: #{tpu_custom_call.1} parent=1 // pred_check
      _
    $region83: #{tpu_custom_call.1} parent=1 // pred_check_branch
      %522 = sbr.rel (0) target = $region85
    $region84: #{tpu_custom_call.1} parent=1 // pred_region
      %524 = vsyncadd [#allocation5], 0
      %s526 = sshll.u32 [#allocation4], 4
      %s527 = int_to_ptr.vmem [resolvable:$true] %s526
      %s528 = sshll.u32 %s20, 4
      %s529 = int_to_ptr.hbm [resolvable:$true] %s528
      %531 = dma.vmem_to_hbm [thread:$0]  %s527, 32, %s529, [#allocation5]
    $region85: #{tpu_custom_call.1} parent=1 // pred_fallthru
      _
    // Predicated region
    $region86: #{tpu_custom_call.1} parent=1 // pred_check
      _
    $region87: #{tpu_custom_call.1} parent=1 // pred_check_branch
      %533 = sbr.rel (0) target = $region89
    $region88: #{tpu_custom_call.1} parent=1 // pred_region
      %535 = dma.done [#allocation3], 32
    $region89: #{tpu_custom_call.1} parent=1 // pred_fallthru
      _
    // Predicated region
    $region90: #{tpu_custom_call.1} parent=1 // pred_check
      _
    $region91: #{tpu_custom_call.1} parent=1 // pred_check_branch
      %537 = sbr.rel (0) target = $region93
    $region92: #{tpu_custom_call.1} parent=1 // pred_region
      %539 = dma.done [#allocation5], 32
    $region93: #{tpu_custom_call.1} parent=1 // pred_fallthru
      _
    %540 = vsyncpa [#allocation3], 1
    %541 = vsyncpa [#allocation5], 1

</llo_original>
